<compile_context>
chip_gen: v5e
topology: v5e:2x2
jax: 0.10.0
libtpu: 0.0.40
codegen_flags: <defaults>
</compile_context>

<pallas_src>
import jax
import jax.numpy as jnp
from jax.experimental import pallas as pl
from jax.experimental.pallas import tpu as pltpu


def _interp_matrix(out_size: int, in_size: int) -> jnp.ndarray:
    """1-D bilinear interpolation matrix, PyTorch semantics (align_corners=False)."""
    o = jnp.arange(out_size, dtype=jnp.float32)
    scale = in_size / out_size
    src = (o + 0.5) * scale - 0.5
    src = jnp.maximum(src, 0.0)               # PyTorch clamps negative source coords
    lo = jnp.floor(src).astype(jnp.int32)
    lo = jnp.minimum(lo, in_size - 1)
    hi = jnp.minimum(lo + 1, in_size - 1)
    frac = src - lo.astype(jnp.float32)
    rows = jnp.arange(out_size)
    W = jnp.zeros((out_size, in_size), jnp.float32)
    W = W.at[rows, lo].add(1.0 - frac)
    W = W.at[rows, hi].add(frac)
    return W


def _upsample_kernel(x_ref, w_ref, o_ref):
    # x_ref: (TR, K)     compute dtype (bf16)
    # w_ref: (K, Nout)   compute dtype, VMEM-resident across grid steps
    # o_ref: (TR, Nout)  output dtype (lane-dense, Nout a multiple of 128)
    o_ref[...] = jnp.dot(
        x_ref[...], w_ref[...], preferred_element_type=jnp.float32
    ).astype(o_ref.dtype)


def _choose_rows_per_block(R, K, Nout, out_itemsize, in_itemsize, w_bytes):
    """Pick TR so output blocks are ~2 MiB/buffer and 2x(in+out)+2*w fits VMEM."""
    target_out_block = 2 << 20          # ~2 MiB output tile per pipeline buffer
    vmem_budget = 12 << 20              # fits v5e/v6e/v7x default scoped VMEM
    tr = max(8, target_out_block // (Nout * out_itemsize))
    per_row = 2 * (Nout * out_itemsize + K * in_itemsize)   # double-buffered in+out
    avail = max(vmem_budget - 2 * w_bytes, 8 * per_row)
    tr = min(tr, avail // per_row)
    tr = max(8, (int(tr) // 8) * 8)                          # sublane-aligned
    r_ceil = ((R + 7) // 8) * 8
    return int(min(tr, r_ceil))


def upsample(x: jnp.ndarray, image_size: int, patch_size,
             *, rows_per_block: int | None = None,
             compute_dtype=jnp.bfloat16) -> jnp.ndarray:
    """x: [B, N, C] -> [B, C, image_size, image_size] (NCHW), bilinear upsample."""
    B, N, C = x.shape
    Hin = image_size // patch_size[0]
    Win = image_size // patch_size[1]
    assert N == Hin * Win, "sequence length must equal (image_size//ph)*(image_size//pw)"
    Hout = Hin * patch_size[0]
    Wout = Win * patch_size[1]
    K = Hin * Win
    Nout = Hout * Wout
    out_dtype = x.dtype
    out_itemsize = jnp.dtype(out_dtype).itemsize
    in_itemsize = jnp.dtype(compute_dtype).itemsize

    # Fused kron bilinear weight: W[h*Win+w, o*Wout+p] = Wh[o,h] * Ww[p,w].
    # The entries are products of k/scale fractions -> exact in bf16 for integer scales.
    wh = _interp_matrix(Hout, Hin)                 # (Hout, Hin)
    ww = _interp_matrix(Wout, Win)                 # (Wout, Win)
    w = (jnp.einsum('oh,pw->hwop', wh, ww)
           .reshape(K, Nout)
           .astype(compute_dtype))                 # (K, Nout), e.g. 16x256 bf16 = 8 KB
    w_bytes = K * Nout * in_itemsize
    # TODO(synk): for very large images where the kron weight (K*Nout*2B) would not
    # fit VMEM, fall back to a separable two-matmul path; not needed for typical
    # segmenter configs.

    R = B * C
    if rows_per_block is None:
        TR = _choose_rows_per_block(R, K, Nout, out_itemsize, in_itemsize, w_bytes)
    else:
        TR = max(8, ((int(rows_per_block) + 7) // 8) * 8)
    num_blocks = (R + TR - 1) // TR
    R_pad = num_blocks * TR

    # 'b (p1 p2) c -> (b c) (p1 p2)': flat, lane-dense 2-D input strip.
    # Touches only the small pre-upsample tensor (patch^2 x smaller than the output).
    x_flat = x.transpose(0, 2, 1).reshape(R, K).astype(compute_dtype)
    if R_pad != R:
        x_flat = jnp.pad(x_flat, ((0, R_pad - R), (0, 0)))

    flops = 2 * R_pad * K * Nout
    bytes_accessed = (R_pad * K * in_itemsize
                      + w_bytes
                      + R_pad * Nout * out_itemsize)

    out_pad = pl.pallas_call(
        _upsample_kernel,
        out_shape=jax.ShapeDtypeStruct((R_pad, Nout), out_dtype),
        grid_spec=pl.GridSpec(
            grid=(num_blocks,),
            in_specs=[
                pl.BlockSpec((TR, K), lambda i: (i, 0)),
                pl.BlockSpec((K, Nout), lambda i: (0, 0)),   # resident fused weight
            ],
            out_specs=pl.BlockSpec((TR, Nout), lambda i: (i, 0)),
        ),
        compiler_params=pltpu.CompilerParams(
            dimension_semantics=("parallel",),   # shards row tiles across TCs on v7x
            vmem_limit_bytes=32 * 1024 * 1024,   # >= default on all generations
        ),
        cost_estimate=pl.CostEstimate(
            flops=flops, transcendentals=0, bytes_accessed=bytes_accessed),
    )(x_flat, w)

    # Row-major (Hout, Wout) flatten matches the kernel's o*Wout+p layout -> free view.
    return out_pad[:R].reshape(B, C, Hout, Wout)


if __name__ == "__main__":
    # Module config: image_size=16, patch_size=(4,4) -> Hin=Win=4, N=16.
    image_size = 16
    patch_size = (4, 4)
    B, C = 2, 32
    Hin = image_size // patch_size[0]
    Win = image_size // patch_size[1]
    N = Hin * Win

    key = jax.random.PRNGKey(0)
    x = jax.random.normal(key, (B, N, C), dtype=jnp.float32)

    # rows_per_block=8 -> grid=(8,): exercises the pipelined / megacore-parallel path.
    out = upsample(x, image_size, patch_size, rows_per_block=8)
    jax.block_until_ready(out)
    assert out.shape == (B, C, image_size, image_size), out.shape

    # Also exercise the auto tile-size path (single large block here).
    out_auto = upsample(x, image_size, patch_size)
    jax.block_until_ready(out_auto)
    assert out_auto.shape == (B, C, image_size, image_size), out_auto.shape

    # Pure-JAX f32 separable reference (same align_corners=False weights).
    wh_f = _interp_matrix(image_size, Hin)
    ww_f = _interp_matrix(image_size, Win)
    x4 = x.transpose(0, 2, 1).reshape(B, C, Hin, Win)
    ref = jnp.einsum('oh,bchw,pw->bcop', wh_f, x4, ww_f)
    err = float(jnp.max(jnp.abs(out.astype(jnp.float32) - ref)))
    err_auto = float(jnp.max(jnp.abs(out_auto.astype(jnp.float32) - ref)))
    assert err < 5e-2, f"max abs err {err}"
    assert err_auto < 5e-2, f"max abs err (auto) {err_auto}"

    print("KERNEL_OK")
</pallas_src>

<mosaic_0001>
module attributes {stable_mosaic.version = 11 : i64} {
  func.func @_upsample_kernel(%arg0: i32, %arg1: memref<8x16xbf16, #tpu.memory_space<vmem>>, %arg2: memref<16x256xbf16, #tpu.memory_space<vmem>>, %arg3: memref<8x256xf32, #tpu.memory_space<vmem>>) attributes {dimension_semantics = [#tpu.dimension_semantics<parallel>], iteration_bounds = array<i64: 8>, scalar_prefetch = 0 : i64, scratch_operands = 0 : i64, tpu.core_type = #tpu.core_type<tc>, window_params = [{transform_indices = @transform_0, window_bounds = array<i64: 8, 16>}, {pipeline_mode = #tpu.pipeline_mode<synchronous>, transform_indices = @transform_1, window_bounds = array<i64: 16, 256>}, {transform_indices = @transform_2, window_bounds = array<i64: 8, 256>}]} {
    %c0 = arith.constant 0 : index
    %c0_0 = arith.constant 0 : index
    %0 = vector.load %arg1[%c0, %c0_0] : memref<8x16xbf16, #tpu.memory_space<vmem>>, vector<8x16xbf16>
    %c0_1 = arith.constant 0 : index
    %c0_2 = arith.constant 0 : index
    %1 = vector.load %arg2[%c0_1, %c0_2] : memref<16x256xbf16, #tpu.memory_space<vmem>>, vector<16x256xbf16>
    %cst = arith.constant dense<0.000000e+00> : vector<8x256xf32>
    %2 = tpu.matmul %0, %1, %cst {dimension_numbers = #tpu.dot_dimension_numbers<[1], [0], [0], [1], [0, 0, 1, 1], [], []>} : vector<8x16xbf16>, vector<16x256xbf16>, vector<8x256xf32> -> vector<8x256xf32>
    %c0_3 = arith.constant 0 : index
    %c0_4 = arith.constant 0 : index
    %3 = vector.load %arg3[%c0_3, %c0_4] : memref<8x256xf32, #tpu.memory_space<vmem>>, vector<8x256xf32>
    tpu.vector_store %arg3[%c0_3, %c0_4], %2 {strides = array<i32>} : memref<8x256xf32, #tpu.memory_space<vmem>>, vector<8x256xf32>,
    return
  }
  func.func @transform_0(%arg0: i32) -> (i32, i32) {
    %c0_i32 = arith.constant 0 : i32
    %c0_i32_0 = arith.constant 0 : i32
    return %arg0, %c0_i32 : i32, i32
  }
  func.func @transform_1(%arg0: i32) -> (i32, i32) {
    %c0_i32 = arith.constant 0 : i32
    %c0_i32_0 = arith.constant 0 : i32
    %c0_i32_1 = arith.constant 0 : i32
    return %c0_i32, %c0_i32_0 : i32, i32
  }
  func.func @transform_2(%arg0: i32) -> (i32, i32) {
    %c0_i32 = arith.constant 0 : i32
    %c0_i32_0 = arith.constant 0 : i32
    return %arg0, %c0_i32 : i32, i32
  }
}

</mosaic_0001>

<llo_original>
// kernel: tpu_custom_call.1
$region0: #{tpu_custom_call.1}
  #allocation0 [shape = 'u32[]', space=smem, size = 0x4, offset = 0x4, fixed_abs, tag = 'smem constant byte address 0x4 - core index']
  #allocation1 [shape = 'u32[72,128]{1,0:T(1,128)}', space=vmem, size = 0x9000, scoped, tag = 'internal scratch']
  %s0 = inlined_call_operand.vmem [shape: bf16[64,16], index: 0, kind: input, shape index: {}]
  %s1 = inlined_call_operand.vmem [shape: bf16[16,256], index: 1, kind: input, shape index: {}]
  %s2 = inlined_call_operand.hbm [shape: f32[64,256], index: 2, kind: output, shape index: {}]
  %s3 = sld [smem:[#allocation0]]
  $region41: #{tpu_custom_call.1} parent=0
    _
  %s5 = ssub.s32 1, %s3
  %s6 = scalar_select 0, %s5, %s3
  $region1: #{tpu_custom_call.1} parent=0
    #allocation2 [shape = 'u8[16384]{0}', space=vmem, size = 0x4000, scoped, tag = 'output window, operand 0']
    #allocation3 [shape = 's32[2]{0}', space=sflag, size = 0x8, scoped, tag = 'scoped memory for tpu_custom_call.1']
    %7 = vsyncpa [#allocation3], 0
    %s8 = scalar_lea.sflag [#allocation3], 1
    %9 = vsyncpa %s8, 0
    loop: start=0, step=1, limit=10
    $region2: #{tpu_custom_call.1} parent=1 // loop_pre_header
      _
    $region3: #{tpu_custom_call.1} parent=1 // loop_header
      %s11 = sphi 0, %s15
      %p12 = scmp.ge.s32.totalorder %s11, 10
      %s21 = sphi 0, %s23
      %s24 = sphi 0, %s21
      %s25 = sphi 0, %s24
      %s41 = sphi 0, %s25
      %s45 = sphi 0, %s45
      %s47 = sphi 0, %s45
      %s48 = sphi 0, %s47
      %s62 = sphi 0, %s48
      %s68 = sphi 0, %s70
      %s71 = sphi 0, %s68
      %s72 = sphi 0, %s71
      %s88 = sphi 0, %s72
    $region4: #{tpu_custom_call.1} parent=1 // loop_header_branch
      %14 = sbr.rel (%p12) target = $region8
    $region5: #{tpu_custom_call.1} parent=1 // loop_body
      %s16 = ssub.s32 %s11, 1
      %s17 = ssub.s32 %s11, 2
      %s18 = sadd.s32 %s11, 1
      %s19 = ssub.s32 %s11, %s18
      %p20 = scmp.eq.s32.totalorder %s19, 0
      %s22 = sadd.s32 %s21, 1
      %s23 = scalar_select %p20, %s21, %s22
      %p26 = pneg %p20
      %p27 = scmp.eq.s32.totalorder %s11, 7
      %p28 = por %p26, %p27
      %p29 = scmp.ne.s32.totalorder %s21, %s24
      %p30 = scmp.eq.s32.totalorder %s11, 0
      %p31 = por %p29, %p30
      %p32 = scmp.ne.s32.totalorder %s21, %s24
      %p33 = scmp.eq.s32.totalorder %s16, 7
      %p34 = por %p32, %p33
      %p35 = scmp.ne.s32.totalorder %s24, %s25
      %p36 = scmp.eq.s32.totalorder %s16, 0
      %p37 = por %p35, %p36
      %p38 = scmp.ne.s32.totalorder %s24, %s25
      %p39 = scmp.eq.s32.totalorder %s17, 7
      %p40 = por %p38, %p39
      %p42 = scmp.ne.s32.totalorder %s25, %s41
      %p43 = scmp.eq.s32.totalorder %s17, 0
      %p44 = por %p42, %p43
      %s46 = sadd.s32 %s45, 1
      %p49 = scmp.eq.s32.totalorder %s11, 7
      %p50 = scmp.ne.s32.totalorder %s45, %s47
      %p51 = scmp.eq.s32.totalorder %s11, 0
      %p52 = por %p50, %p51
      %p53 = scmp.ne.s32.totalorder %s45, %s47
      %p54 = scmp.eq.s32.totalorder %s16, 7
      %p55 = por %p53, %p54
      %p56 = scmp.ne.s32.totalorder %s47, %s48
      %p57 = scmp.eq.s32.totalorder %s16, 0
      %p58 = por %p56, %p57
      %p59 = scmp.ne.s32.totalorder %s47, %s48
      %p60 = scmp.eq.s32.totalorder %s17, 7
      %p61 = por %p59, %p60
      %p63 = scmp.ne.s32.totalorder %s48, %s62
      %p64 = scmp.eq.s32.totalorder %s17, 0
      %p65 = por %p63, %p64
      %s66 = ssub.s32 %s11, %s18
      %p67 = scmp.eq.s32.totalorder %s66, 0
      %s69 = sadd.s32 %s68, 1
      %s70 = scalar_select %p67, %s68, %s69
      %p73 = pneg %p67
      %p74 = scmp.eq.s32.totalorder %s11, 7
      %p75 = por %p73, %p74
      %p76 = scmp.ne.s32.totalorder %s68, %s71
      %p77 = scmp.eq.s32.totalorder %s11, 0
      %p78 = por %p76, %p77
      %p79 = scmp.ne.s32.totalorder %s68, %s71
      %p80 = scmp.eq.s32.totalorder %s16, 7
      %p81 = por %p79, %p80
      %p82 = scmp.ne.s32.totalorder %s71, %s72
      %p83 = scmp.eq.s32.totalorder %s16, 0
      %p84 = por %p82, %p83
      %p85 = scmp.ne.s32.totalorder %s71, %s72
      %p86 = scmp.eq.s32.totalorder %s17, 7
      %p87 = por %p85, %p86
      %p89 = scmp.ne.s32.totalorder %s72, %s88
      %p90 = scmp.eq.s32.totalorder %s17, 0
      %p91 = por %p89, %p90
      %p92 = scmp.le.s32.totalorder 1, %s11
      %p93 = scmp.lt.s32.totalorder %s11, 9
      %p94 = pnand %p92, %p93
      %p95 = pneg %p94
      // Predicated region
      $region9: #{tpu_custom_call.1} parent=5 // pred_check
        _
      $region10: #{tpu_custom_call.1} parent=5 // pred_check_branch
        %97 = sbr.rel (%p94) target = $region12
      $region11: #{tpu_custom_call.1} parent=5 // pred_region
        %s98 = ssub.s32 %s11, 1
        // Predicated region
        $region13: #{tpu_custom_call.1} parent=11 // pred_check
          %p99 = pneg %p58
        $region14: #{tpu_custom_call.1} parent=11 // pred_check_branch
          %101 = sbr.rel (%p99) target = $region16
        $region15: #{tpu_custom_call.1} parent=11 // pred_region
          _
        $region16: #{tpu_custom_call.1} parent=11 // pred_fallthru
          _
      $region12: #{tpu_custom_call.1} parent=5 // pred_fallthru
        _
      %p102 = scmp.lt.s32.totalorder %s11, 8
      // Predicated region
      $region17: #{tpu_custom_call.1} parent=5 // pred_check
        %p103 = pneg %p102
      $region18: #{tpu_custom_call.1} parent=5 // pred_check_branch
        %105 = sbr.rel (%p103) target = $region20
      $region19: #{tpu_custom_call.1} parent=5 // pred_region
        // Predicated region
        $region21: #{tpu_custom_call.1} parent=19 // pred_check
          %p106 = pneg %p31
        $region22: #{tpu_custom_call.1} parent=19 // pred_check_branch
          %108 = sbr.rel (%p106) target = $region24
        $region23: #{tpu_custom_call.1} parent=19 // pred_region
          %p109 = scmp.lt.s32.totalorder %s11, 7
          %s110 = scalar_select %p109, %s11, 7
          %s111 = smul.addr %s110, 4
          %s112 = scalar_lea.vmem %s0, %s111
        $region24: #{tpu_custom_call.1} parent=19 // pred_fallthru
          _
      $region20: #{tpu_custom_call.1} parent=5 // pred_fallthru
        _
      %p113 = scmp.le.s32.totalorder 1, %s11
      %p114 = scmp.lt.s32.totalorder %s11, 9
      %p115 = pnand %p113, %p114
      %p116 = pneg %p115
      // Predicated region
      $region25: #{tpu_custom_call.1} parent=5 // pred_check
        _
      $region26: #{tpu_custom_call.1} parent=5 // pred_check_branch
        %118 = sbr.rel (%p115) target = $region28
      $region27: #{tpu_custom_call.1} parent=5 // pred_region
        %s119 = ssub.s32 %s11, 1
        %p120 = scmp.lt.s32.totalorder %s16, 7
        %s121 = scalar_select %p120, %s16, 7
        %s122 = smul.addr %s121, 4
        %s123 = scalar_lea.vmem %s0, %s122
        %p124 = pneg %p37
        %p125 = pneg %p34
        %p126 = pneg %p58
        %p127 = pneg %p55
        %p128 = pneg %p84
        %p129 = pneg %p81
        %s130 = sand.u32 %s71, 1
        %s131 = scalar_lea.sflag [#allocation3], %s130
        %s132 = sand.u32 %s71, 1
        %s133 = smul.addr %s132, 16
        %s134 = scalar_lea.vmem [#allocation2], %s133
        %p135 = scmp.lt.s32.totalorder %s16, 7
        %s136 = scalar_select %p135, %s16, 7
        %s137 = smul.addr %s136, 4
        %s138 = scalar_lea.vmem %s0, %s137
        %v140 = vld [vmem:[%s138] sm:$0xf]
        %v141 = vld [vmem:[%s1] sm:$0xff]
        %v142 = vld [vmem:[%s1 + $0x8] sm:$0xff]
        %v145 = vunpack.c.l.b16 %v141
        %v146 = vunpack.c.h.b16 %v141
        %v147 = vunpack.c.l.b16 %v142
        %v148 = vunpack.c.h.b16 %v142
        %v149 = vpack.c.b16 %v147, %v145
        %v150 = vpack.c.b16 %v148, %v146
        %vm153 = vcmask 130048
        %v155 = vsel %vm153, %v140, 0
        %157 = vmatpush.bf16.msra.mxu0 0
        %158 = vmatpush.bf16.msra.mxu0 0
        %159 = vmatpush.bf16.msra.mxu0 0
        %160 = vmatpush.bf16.msra.mxu0 0
        %161 = vmatpush.bf16.msra.mxu0 0
        %162 = vmatpush.bf16.msra.mxu0 0
        %163 = vmatpush.bf16.msra.mxu0 0
        %164 = vmatpush.bf16.msra.mxu0 %v149
        %165 = vmatmul.bf16.gmra.mxu0 %v155
        %v166 = vpop.f32.mrf.mxu0
        %v167 = vadd.f32 0.0, %v166
        %v168 = vpop.f32.mrf.mxu0
        %169 = vdwg.mxu0
        %170 = vmatpush.bf16.msra.mxu0 0
        %171 = vmatpush.bf16.msra.mxu0 0
        %172 = vmatpush.bf16.msra.mxu0 0
        %173 = vmatpush.bf16.msra.mxu0 0
        %174 = vmatpush.bf16.msra.mxu0 0
        %175 = vmatpush.bf16.msra.mxu0 0
        %176 = vmatpush.bf16.msra.mxu0 0
        %177 = vmatpush.bf16.msra.mxu0 %v150
        %178 = vmatmul.bf16.gmra.mxu0 %v155
        %v179 = vpop.f32.mrf.mxu0
        %v180 = vadd.f32 0.0, %v179
        %v181 = vpop.f32.mrf.mxu0
        %182 = vdwg.mxu0
        %183 = vst [vmem:[%s134] sm:$0xff] %v167
        %184 = vst [vmem:[%s134 + $0x8] sm:$0xff] %v180
        %s185 = sand.u32 %s71, 1
        %s186 = scalar_lea.sflag [#allocation3], %s185
        %s187 = sand.u32 %s71, 1
        %s188 = smul.addr %s187, 16
        %s189 = scalar_lea.vmem [#allocation2], %s188
        // Predicated region
        $region29: #{tpu_custom_call.1} parent=27 // pred_check
          %p190 = pneg %p81
        $region30: #{tpu_custom_call.1} parent=27 // pred_check_branch
          %192 = sbr.rel (%p190) target = $region32
        $region31: #{tpu_custom_call.1} parent=27 // pred_region
          %194 = vsyncadd %s186, 0
          %s195 = smul.addr %s16, 2
          %s196 = smul.addr %s195, 8
          %s197 = scalar_lea.hbm %s2, %s196
          %s199 = sshll.u32 %s189, 4
          %s200 = int_to_ptr.vmem [resolvable:$true] %s199
          %s201 = sshll.u32 %s197, 4
          %s202 = int_to_ptr.hbm [resolvable:$true] %s201
          %204 = dma.vmem_to_hbm [thread:$0]  %s200, 256, %s202, %s186
        $region32: #{tpu_custom_call.1} parent=27 // pred_fallthru
          _
      $region28: #{tpu_custom_call.1} parent=5 // pred_fallthru
        _
      %p205 = scmp.le.s32.totalorder 2, %s11
      // Predicated region
      $region33: #{tpu_custom_call.1} parent=5 // pred_check
        %p206 = pneg %p205
      $region34: #{tpu_custom_call.1} parent=5 // pred_check_branch
        %208 = sbr.rel (%p206) target = $region36
      $region35: #{tpu_custom_call.1} parent=5 // pred_region
        %s209 = ssub.s32 %s11, 2
        // Predicated region
        $region37: #{tpu_custom_call.1} parent=35 // pred_check
          %p210 = pneg %p87
        $region38: #{tpu_custom_call.1} parent=35 // pred_check_branch
          %212 = sbr.rel (%p210) target = $region40
        $region39: #{tpu_custom_call.1} parent=35 // pred_region
          %s213 = sand.u32 %s72, 1
          %s214 = scalar_lea.sflag [#allocation3], %s213
          %s215 = sand.u32 %s72, 1
          %s216 = smul.addr %s215, 16
          %s217 = scalar_lea.vmem [#allocation2], %s216
          %219 = dma.done %s214, 256
        $region40: #{tpu_custom_call.1} parent=35 // pred_fallthru
          _
      $region36: #{tpu_custom_call.1} parent=5 // pred_fallthru
        _
    $region6: #{tpu_custom_call.1} parent=1 // loop_footer
      %s15 = sadd.s32 1, %s11
    $region7: #{tpu_custom_call.1} parent=1 // loop_footer_branch
      %10 = sbr.rel target = $region3
    $region8: #{tpu_custom_call.1} parent=1 // loop_exit
      _
    %220 = vsyncpa [#allocation3], 1
    %s221 = scalar_lea.sflag [#allocation3], 1
    %222 = vsyncpa %s221, 1

</llo_original>
